<compile_context>
chip_gen: v5e
topology: v5e:2x2
jax: 0.10.0
libtpu: 0.0.40
codegen_flags: <defaults>
</compile_context>

<pallas_src>
import functools

import jax
import jax.numpy as jnp
from jax.experimental import pallas as pl
from jax.experimental.pallas import tpu as pltpu


def _round_up(n, m):
    return ((n + m - 1) // m) * m


def simple_nn_kernel(x_ref, w1_ref, b1_ref, w2_ref, b2_ref, w3_ref, b3_ref,
                     out_ref):
    # Layer 1: Linear(input_dim, 128) + ReLU.  bf16 operands, f32 accumulate.
    h1 = jnp.dot(x_ref[...], w1_ref[...], preferred_element_type=jnp.float32)
    h1 = jnp.maximum(h1 + b1_ref[...], 0.0)                     # f32 (TB, 128)

    # Layer 2: Linear(128, 64) + ReLU.  Cast to bf16 only for the dot.
    h2 = jnp.dot(h1.astype(jnp.bfloat16), w2_ref[...],
                 preferred_element_type=jnp.float32)
    h2 = jnp.maximum(h2 + b2_ref[...], 0.0)                     # f32 (TB, 64)

    # Layer 3: Linear(64, 1) + Sigmoid.  N=1 -> VPU multiply + lane reduce
    # (an N=1 MXU pass would use 1/128..1/256 of the array for full latency).
    h3 = jnp.sum(h2 * w3_ref[...], axis=-1, keepdims=True) + b3_ref[...]
    out_ref[...] = jax.nn.sigmoid(h3).astype(out_ref.dtype)     # (TB, 1)


@functools.partial(jax.jit, static_argnames=("block_batch",))
def simple_nn_forward(x, params, *, block_batch=512):
    """x: [batch, input_dim] float32. params: dict with w1 (in,128), b1 (1,128),
    w2 (128,64), b2 (1,64), w3 (64,1), b3 (1,1)."""
    batch, input_dim = x.shape
    out_dim = 1  # layer-3 reduce formulation assumes a single output unit

    # Batch tile: multiple of 16 sublanes (bf16 x tile), capped at block_batch.
    # TB=512 keeps combined buffers far below the VMEM scoped default on all
    # of v5e/v6e/v7x (re-sweep / halve on v7x if pushed much larger).
    tb = _round_up(min(block_batch, batch), 16)
    batch_pad = _round_up(batch, tb)
    if batch_pad != batch:
        x = jnp.pad(x, ((0, batch_pad - batch), (0, 0)))
    n_tiles = batch_pad // tb

    # bf16 MXU operands (halves HBM traffic for x); biases / layer-3 row in f32.
    x_bf = x.astype(jnp.bfloat16)
    w1 = params["w1"].astype(jnp.bfloat16)                  # (input_dim, 128)
    w2 = params["w2"].astype(jnp.bfloat16)                  # (128, 64)
    b1 = params["b1"].astype(jnp.float32)                   # (1, 128)
    b2 = params["b2"].astype(jnp.float32)                   # (1, 64)
    w3 = params["w3"].astype(jnp.float32).reshape(1, -1)    # (1, 64) row
    b3 = params["b3"].astype(jnp.float32).reshape(1, 1)     # (1, 1)

    resident = lambda shape: pl.BlockSpec(shape, lambda i: (0, 0))

    out = pl.pallas_call(
        simple_nn_kernel,
        out_shape=jax.ShapeDtypeStruct((batch_pad, out_dim), jnp.float32),
        grid_spec=pltpu.PrefetchScalarGridSpec(
            num_scalar_prefetch=0,
            grid=(n_tiles,),
            in_specs=[
                pl.BlockSpec((tb, input_dim), lambda i: (i, 0)),  # x tile
                resident(w1.shape), resident(b1.shape),           # layer 1
                resident(w2.shape), resident(b2.shape),           # layer 2
                resident(w3.shape), resident(b3.shape),           # layer 3
            ],
            out_specs=pl.BlockSpec((tb, out_dim), lambda i: (i, 0)),
        ),
        compiler_params=pltpu.CompilerParams(
            dimension_semantics=("parallel",)),
    )(x_bf, w1, b1, w2, b2, w3, b3)

    return out[:batch]


def init_params(key, input_dim, output=1):
    """Deterministic init mimicking nn.Linear shapes; weights stored as [in, out]."""
    ks = jax.random.split(key, 6)

    def uniform_init(k, shape, fan_in):
        bound = 1.0 / jnp.sqrt(fan_in)
        return jax.random.uniform(k, shape, jnp.float32, -bound, bound)

    return {
        "w1": uniform_init(ks[0], (input_dim, 128), input_dim),
        "b1": uniform_init(ks[1], (1, 128), input_dim),
        "w2": uniform_init(ks[2], (128, 64), 128),
        "b2": uniform_init(ks[3], (1, 64), 128),
        "w3": uniform_init(ks[4], (64, output), 64),
        "b3": uniform_init(ks[5], (1, output), 64),
    }


def reference_forward(x, params):
    """Pure-JAX f32 reference for correctness check."""
    h = jnp.maximum(x @ params["w1"] + params["b1"], 0.0)
    h = jnp.maximum(h @ params["w2"] + params["b2"], 0.0)
    return jax.nn.sigmoid(h @ params["w3"] + params["b3"])


if __name__ == "__main__":
    key = jax.random.PRNGKey(0)
    k_x, k_p = jax.random.split(key)

    batch, input_dim = 64, 32
    x = jax.random.normal(k_x, (batch, input_dim), jnp.float32)
    params = init_params(k_p, input_dim, output=1)

    # block_batch=16 -> 4 batch tiles, exercising the pipelined/parallel grid.
    out = simple_nn_forward(x, params, block_batch=16)
    out = jax.block_until_ready(out)

    ref = reference_forward(x, params)
    assert out.shape == (batch, 1), out.shape
    max_err = float(jnp.max(jnp.abs(out - ref)))
    # bf16 matmul operands with f32 accumulation -> loosened tolerance.
    assert max_err < 2e-2, f"mismatch vs reference: max abs err {max_err}"

    print("KERNEL_OK")
</pallas_src>

<mosaic_0001>
module attributes {stable_mosaic.version = 11 : i64} {
  func.func @simple_nn_kernel(%arg0: i32, %arg1: memref<16x32xbf16, #tpu.memory_space<vmem>>, %arg2: memref<32x128xbf16, #tpu.memory_space<vmem>>, %arg3: memref<1x128xf32, #tpu.memory_space<vmem>>, %arg4: memref<128x64xbf16, #tpu.memory_space<vmem>>, %arg5: memref<1x64xf32, #tpu.memory_space<vmem>>, %arg6: memref<1x64xf32, #tpu.memory_space<vmem>>, %arg7: memref<1x1xf32, #tpu.memory_space<vmem>>, %arg8: memref<16x1xf32, #tpu.memory_space<vmem>>) attributes {dimension_semantics = [#tpu.dimension_semantics<parallel>], iteration_bounds = array<i64: 4>, scalar_prefetch = 0 : i64, scratch_operands = 0 : i64, tpu.core_type = #tpu.core_type<tc>, window_params = [{transform_indices = @transform_0, window_bounds = array<i64: 16, 32>}, {pipeline_mode = #tpu.pipeline_mode<synchronous>, transform_indices = @transform_1, window_bounds = array<i64: 32, 128>}, {pipeline_mode = #tpu.pipeline_mode<synchronous>, transform_indices = @transform_2, window_bounds = array<i64: 1, 128>}, {pipeline_mode = #tpu.pipeline_mode<synchronous>, transform_indices = @transform_3, window_bounds = array<i64: 128, 64>}, {pipeline_mode = #tpu.pipeline_mode<synchronous>, transform_indices = @transform_4, window_bounds = array<i64: 1, 64>}, {pipeline_mode = #tpu.pipeline_mode<synchronous>, transform_indices = @transform_5, window_bounds = array<i64: 1, 64>}, {pipeline_mode = #tpu.pipeline_mode<synchronous>, transform_indices = @transform_6, window_bounds = array<i64: 1, 1>}, {transform_indices = @transform_7, window_bounds = array<i64: 16, 1>}]} {
    %c0 = arith.constant 0 : index
    %c0_0 = arith.constant 0 : index
    %0 = vector.load %arg1[%c0, %c0_0] : memref<16x32xbf16, #tpu.memory_space<vmem>>, vector<16x32xbf16>
    %c0_1 = arith.constant 0 : index
    %c0_2 = arith.constant 0 : index
    %1 = vector.load %arg2[%c0_1, %c0_2] : memref<32x128xbf16, #tpu.memory_space<vmem>>, vector<32x128xbf16>
    %cst = arith.constant dense<0.000000e+00> : vector<16x128xf32>
    %2 = tpu.matmul %0, %1, %cst {dimension_numbers = #tpu.dot_dimension_numbers<[1], [0], [0], [1], [0, 0, 1, 1], [], []>} : vector<16x32xbf16>, vector<32x128xbf16>, vector<16x128xf32> -> vector<16x128xf32>
    %c0_3 = arith.constant 0 : index
    %c0_4 = arith.constant 0 : index
    %3 = vector.load %arg3[%c0_3, %c0_4] : memref<1x128xf32, #tpu.memory_space<vmem>>, vector<1x128xf32>
    %4 = vector.broadcast %3 : vector<1x128xf32> to vector<16x128xf32>
    %5 = arith.addf %2, %4 : vector<16x128xf32>
    %cst_5 = arith.constant 0.000000e+00 : f32
    %6 = vector.broadcast %cst_5 : f32 to vector<16x128xf32>
    %7 = arith.maximumf %5, %6 : vector<16x128xf32>
    %8 = arith.truncf %7 : vector<16x128xf32> to vector<16x128xbf16>
    %c0_6 = arith.constant 0 : index
    %c0_7 = arith.constant 0 : index
    %9 = vector.load %arg4[%c0_6, %c0_7] : memref<128x64xbf16, #tpu.memory_space<vmem>>, vector<128x64xbf16>
    %cst_8 = arith.constant dense<0.000000e+00> : vector<16x64xf32>
    %10 = tpu.matmul %8, %9, %cst_8 {dimension_numbers = #tpu.dot_dimension_numbers<[1], [0], [0], [1], [0, 0, 1, 1], [], []>} : vector<16x128xbf16>, vector<128x64xbf16>, vector<16x64xf32> -> vector<16x64xf32>
    %c0_9 = arith.constant 0 : index
    %c0_10 = arith.constant 0 : index
    %11 = vector.load %arg5[%c0_9, %c0_10] : memref<1x64xf32, #tpu.memory_space<vmem>>, vector<1x64xf32>
    %12 = vector.broadcast %11 : vector<1x64xf32> to vector<16x64xf32>
    %13 = arith.addf %10, %12 : vector<16x64xf32>
    %cst_11 = arith.constant 0.000000e+00 : f32
    %14 = vector.broadcast %cst_11 : f32 to vector<16x64xf32>
    %15 = arith.maximumf %13, %14 : vector<16x64xf32>
    %c0_12 = arith.constant 0 : index
    %c0_13 = arith.constant 0 : index
    %16 = vector.load %arg6[%c0_12, %c0_13] : memref<1x64xf32, #tpu.memory_space<vmem>>, vector<1x64xf32>
    %17 = vector.broadcast %16 : vector<1x64xf32> to vector<16x64xf32>
    %18 = arith.mulf %15, %17 : vector<16x64xf32>
    %cst_14 = arith.constant dense<0.000000e+00> : vector<16xf32>
    %19 = vector.multi_reduction <add>, %18, %cst_14 [1] : vector<16x64xf32> to vector<16xf32>
    %20 = vector.shape_cast %19 : vector<16xf32> to vector<16x1xf32>
    %c0_15 = arith.constant 0 : index
    %c0_16 = arith.constant 0 : index
    %21 = vector.load %arg7[%c0_15, %c0_16] : memref<1x1xf32, #tpu.memory_space<vmem>>, vector<1x1xf32>
    %22 = vector.broadcast %21 : vector<1x1xf32> to vector<16x1xf32>
    %23 = arith.addf %20, %22 : vector<16x1xf32>
    %24 = arith.negf %23 : vector<16x1xf32>
    %25 = math.exp %24 : vector<16x1xf32>
    %cst_17 = arith.constant 1.000000e+00 : f32
    %26 = vector.broadcast %cst_17 : f32 to vector<16x1xf32>
    %27 = arith.addf %26, %25 : vector<16x1xf32>
    %28 = arith.divf %26, %27 : vector<16x1xf32>
    %c0_18 = arith.constant 0 : index
    %c0_19 = arith.constant 0 : index
    %29 = vector.load %arg8[%c0_18, %c0_19] : memref<16x1xf32, #tpu.memory_space<vmem>>, vector<16x1xf32>
    tpu.vector_store %arg8[%c0_18, %c0_19], %28 {strides = array<i32>} : memref<16x1xf32, #tpu.memory_space<vmem>>, vector<16x1xf32>,
    return
  }
  func.func @transform_0(%arg0: i32) -> (i32, i32) {
    %c0_i32 = arith.constant 0 : i32
    %c0_i32_0 = arith.constant 0 : i32
    return %arg0, %c0_i32 : i32, i32
  }
  func.func @transform_1(%arg0: i32) -> (i32, i32) {
    %c0_i32 = arith.constant 0 : i32
    %c0_i32_0 = arith.constant 0 : i32
    %c0_i32_1 = arith.constant 0 : i32
    return %c0_i32, %c0_i32_0 : i32, i32
  }
  func.func @transform_2(%arg0: i32) -> (i32, i32) {
    %c0_i32 = arith.constant 0 : i32
    %c0_i32_0 = arith.constant 0 : i32
    %c0_i32_1 = arith.constant 0 : i32
    return %c0_i32, %c0_i32_0 : i32, i32
  }
  func.func @transform_3(%arg0: i32) -> (i32, i32) {
    %c0_i32 = arith.constant 0 : i32
    %c0_i32_0 = arith.constant 0 : i32
    %c0_i32_1 = arith.constant 0 : i32
    return %c0_i32, %c0_i32_0 : i32, i32
  }
  func.func @transform_4(%arg0: i32) -> (i32, i32) {
    %c0_i32 = arith.constant 0 : i32
    %c0_i32_0 = arith.constant 0 : i32
    %c0_i32_1 = arith.constant 0 : i32
    return %c0_i32, %c0_i32_0 : i32, i32
  }
  func.func @transform_5(%arg0: i32) -> (i32, i32) {
    %c0_i32 = arith.constant 0 : i32
    %c0_i32_0 = arith.constant 0 : i32
    %c0_i32_1 = arith.constant 0 : i32
    return %c0_i32, %c0_i32_0 : i32, i32
  }
  func.func @transform_6(%arg0: i32) -> (i32, i32) {
    %c0_i32 = arith.constant 0 : i32
    %c0_i32_0 = arith.constant 0 : i32
    %c0_i32_1 = arith.constant 0 : i32
    return %c0_i32, %c0_i32_0 : i32, i32
  }
  func.func @transform_7(%arg0: i32) -> (i32, i32) {
    %c0_i32 = arith.constant 0 : i32
    %c0_i32_0 = arith.constant 0 : i32
    return %arg0, %c0_i32 : i32, i32
  }
}

</mosaic_0001>

<llo_original>
// kernel: simple_nn_forward.1
$region0: #{simple_nn_forward.1}
  #allocation0 [shape = 'u32[]', space=smem, size = 0x4, offset = 0x4, fixed_abs, tag = 'smem constant byte address 0x4 - core index']
  #allocation1 [shape = 'u32[72,128]{1,0:T(1,128)}', space=vmem, size = 0x9000, scoped, tag = 'internal scratch']
  #allocation2 [shape = 'f32[1,1]{1,0:T(1,128)S(1)}', space=vmem, size = 0x200, scoped, tag = 'scoped memory for simple_nn_forward.1']
  %s0 = inlined_call_operand.vmem [shape: bf16[64,32], index: 0, kind: input, shape index: {}]
  %s1 = inlined_call_operand.vmem [shape: bf16[32,128], index: 1, kind: input, shape index: {}]
  %s2 = inlined_call_operand.vmem [shape: f32[1,128], index: 2, kind: input, shape index: {}]
  %s3 = inlined_call_operand.vmem [shape: bf16[128,64], index: 3, kind: input, shape index: {}]
  %s4 = inlined_call_operand.vmem [shape: f32[1,64], index: 4, kind: input, shape index: {}]
  %s5 = inlined_call_operand.vmem [shape: f32[1,64], index: 5, kind: input, shape index: {}]
  %s6 = inlined_call_operand.<no memory space> [shape: f32[1,1], index: 6, kind: input, shape index: {}]
  %s7 = inlined_call_operand.vmem [shape: f32[64,1], index: 7, kind: output, shape index: {}]
  %s8 = sld [smem:[#allocation0]]
  $region61: #{simple_nn_forward.1} parent=0
    _
  %s10 = ssub.s32 1, %s8
  %s11 = scalar_select 0, %s10, %s8
  %v12 = vstv %s6
  %13 = vst [vmem:[#allocation2] sm:$0x1] %v12
  loop: start=0, step=1, limit=6
  $region2: #{simple_nn_forward.1} parent=0 // loop_pre_header
    _
  $region3: #{simple_nn_forward.1} parent=0 // loop_header
    %s15 = sphi 0, %s19
    %p16 = scmp.ge.s32.totalorder %s15, 6
    %s25 = sphi 0, %s27
    %s28 = sphi 0, %s25
    %s29 = sphi 0, %s28
    %s45 = sphi 0, %s29
    %s49 = sphi 0, %s49
    %s51 = sphi 0, %s49
    %s52 = sphi 0, %s51
    %s66 = sphi 0, %s52
    %s70 = sphi 0, %s70
    %s72 = sphi 0, %s70
    %s73 = sphi 0, %s72
    %s87 = sphi 0, %s73
    %s91 = sphi 0, %s91
    %s93 = sphi 0, %s91
    %s94 = sphi 0, %s93
    %s108 = sphi 0, %s94
    %s112 = sphi 0, %s112
    %s114 = sphi 0, %s112
    %s115 = sphi 0, %s114
    %s129 = sphi 0, %s115
    %s133 = sphi 0, %s133
    %s135 = sphi 0, %s133
    %s136 = sphi 0, %s135
    %s150 = sphi 0, %s136
    %s154 = sphi 0, %s154
    %s156 = sphi 0, %s154
    %s157 = sphi 0, %s156
    %s171 = sphi 0, %s157
    %s177 = sphi 0, %s179
    %s180 = sphi 0, %s177
    %s181 = sphi 0, %s180
    %s197 = sphi 0, %s181
  $region4: #{simple_nn_forward.1} parent=0 // loop_header_branch
    %18 = sbr.rel (%p16) target = $region8
  $region5: #{simple_nn_forward.1} parent=0 // loop_body
    %s20 = ssub.s32 %s15, 1
    %s21 = ssub.s32 %s15, 2
    %s22 = sadd.s32 %s15, 1
    %s23 = ssub.s32 %s15, %s22
    %p24 = scmp.eq.s32.totalorder %s23, 0
    %s26 = sadd.s32 %s25, 1
    %s27 = scalar_select %p24, %s25, %s26
    %p30 = pneg %p24
    %p31 = scmp.eq.s32.totalorder %s15, 3
    %p32 = por %p30, %p31
    %p33 = scmp.ne.s32.totalorder %s25, %s28
    %p34 = scmp.eq.s32.totalorder %s15, 0
    %p35 = por %p33, %p34
    %p36 = scmp.ne.s32.totalorder %s25, %s28
    %p37 = scmp.eq.s32.totalorder %s20, 3
    %p38 = por %p36, %p37
    %p39 = scmp.ne.s32.totalorder %s28, %s29
    %p40 = scmp.eq.s32.totalorder %s20, 0
    %p41 = por %p39, %p40
    %p42 = scmp.ne.s32.totalorder %s28, %s29
    %p43 = scmp.eq.s32.totalorder %s21, 3
    %p44 = por %p42, %p43
    %p46 = scmp.ne.s32.totalorder %s29, %s45
    %p47 = scmp.eq.s32.totalorder %s21, 0
    %p48 = por %p46, %p47
    %s50 = sadd.s32 %s49, 1
    %p53 = scmp.eq.s32.totalorder %s15, 3
    %p54 = scmp.ne.s32.totalorder %s49, %s51
    %p55 = scmp.eq.s32.totalorder %s15, 0
    %p56 = por %p54, %p55
    %p57 = scmp.ne.s32.totalorder %s49, %s51
    %p58 = scmp.eq.s32.totalorder %s20, 3
    %p59 = por %p57, %p58
    %p60 = scmp.ne.s32.totalorder %s51, %s52
    %p61 = scmp.eq.s32.totalorder %s20, 0
    %p62 = por %p60, %p61
    %p63 = scmp.ne.s32.totalorder %s51, %s52
    %p64 = scmp.eq.s32.totalorder %s21, 3
    %p65 = por %p63, %p64
    %p67 = scmp.ne.s32.totalorder %s52, %s66
    %p68 = scmp.eq.s32.totalorder %s21, 0
    %p69 = por %p67, %p68
    %s71 = sadd.s32 %s70, 1
    %p74 = scmp.eq.s32.totalorder %s15, 3
    %p75 = scmp.ne.s32.totalorder %s70, %s72
    %p76 = scmp.eq.s32.totalorder %s15, 0
    %p77 = por %p75, %p76
    %p78 = scmp.ne.s32.totalorder %s70, %s72
    %p79 = scmp.eq.s32.totalorder %s20, 3
    %p80 = por %p78, %p79
    %p81 = scmp.ne.s32.totalorder %s72, %s73
    %p82 = scmp.eq.s32.totalorder %s20, 0
    %p83 = por %p81, %p82
    %p84 = scmp.ne.s32.totalorder %s72, %s73
    %p85 = scmp.eq.s32.totalorder %s21, 3
    %p86 = por %p84, %p85
    %p88 = scmp.ne.s32.totalorder %s73, %s87
    %p89 = scmp.eq.s32.totalorder %s21, 0
    %p90 = por %p88, %p89
    %s92 = sadd.s32 %s91, 1
    %p95 = scmp.eq.s32.totalorder %s15, 3
    %p96 = scmp.ne.s32.totalorder %s91, %s93
    %p97 = scmp.eq.s32.totalorder %s15, 0
    %p98 = por %p96, %p97
    %p99 = scmp.ne.s32.totalorder %s91, %s93
    %p100 = scmp.eq.s32.totalorder %s20, 3
    %p101 = por %p99, %p100
    %p102 = scmp.ne.s32.totalorder %s93, %s94
    %p103 = scmp.eq.s32.totalorder %s20, 0
    %p104 = por %p102, %p103
    %p105 = scmp.ne.s32.totalorder %s93, %s94
    %p106 = scmp.eq.s32.totalorder %s21, 3
    %p107 = por %p105, %p106
    %p109 = scmp.ne.s32.totalorder %s94, %s108
    %p110 = scmp.eq.s32.totalorder %s21, 0
    %p111 = por %p109, %p110
    %s113 = sadd.s32 %s112, 1
    %p116 = scmp.eq.s32.totalorder %s15, 3
    %p117 = scmp.ne.s32.totalorder %s112, %s114
    %p118 = scmp.eq.s32.totalorder %s15, 0
    %p119 = por %p117, %p118
    %p120 = scmp.ne.s32.totalorder %s112, %s114
    %p121 = scmp.eq.s32.totalorder %s20, 3
    %p122 = por %p120, %p121
    %p123 = scmp.ne.s32.totalorder %s114, %s115
    %p124 = scmp.eq.s32.totalorder %s20, 0
    %p125 = por %p123, %p124
    %p126 = scmp.ne.s32.totalorder %s114, %s115
    %p127 = scmp.eq.s32.totalorder %s21, 3
    %p128 = por %p126, %p127
    %p130 = scmp.ne.s32.totalorder %s115, %s129
    %p131 = scmp.eq.s32.totalorder %s21, 0
    %p132 = por %p130, %p131
    %s134 = sadd.s32 %s133, 1
    %p137 = scmp.eq.s32.totalorder %s15, 3
    %p138 = scmp.ne.s32.totalorder %s133, %s135
    %p139 = scmp.eq.s32.totalorder %s15, 0
    %p140 = por %p138, %p139
    %p141 = scmp.ne.s32.totalorder %s133, %s135
    %p142 = scmp.eq.s32.totalorder %s20, 3
    %p143 = por %p141, %p142
    %p144 = scmp.ne.s32.totalorder %s135, %s136
    %p145 = scmp.eq.s32.totalorder %s20, 0
    %p146 = por %p144, %p145
    %p147 = scmp.ne.s32.totalorder %s135, %s136
    %p148 = scmp.eq.s32.totalorder %s21, 3
    %p149 = por %p147, %p148
    %p151 = scmp.ne.s32.totalorder %s136, %s150
    %p152 = scmp.eq.s32.totalorder %s21, 0
    %p153 = por %p151, %p152
    %s155 = sadd.s32 %s154, 1
    %p158 = scmp.eq.s32.totalorder %s15, 3
    %p159 = scmp.ne.s32.totalorder %s154, %s156
    %p160 = scmp.eq.s32.totalorder %s15, 0
    %p161 = por %p159, %p160
    %p162 = scmp.ne.s32.totalorder %s154, %s156
    %p163 = scmp.eq.s32.totalorder %s20, 3
    %p164 = por %p162, %p163
    %p165 = scmp.ne.s32.totalorder %s156, %s157
    %p166 = scmp.eq.s32.totalorder %s20, 0
    %p167 = por %p165, %p166
    %p168 = scmp.ne.s32.totalorder %s156, %s157
    %p169 = scmp.eq.s32.totalorder %s21, 3
    %p170 = por %p168, %p169
    %p172 = scmp.ne.s32.totalorder %s157, %s171
    %p173 = scmp.eq.s32.totalorder %s21, 0
    %p174 = por %p172, %p173
    %s175 = ssub.s32 %s15, %s22
    %p176 = scmp.eq.s32.totalorder %s175, 0
    %s178 = sadd.s32 %s177, 1
    %s179 = scalar_select %p176, %s177, %s178
    %p182 = pneg %p176
    %p183 = scmp.eq.s32.totalorder %s15, 3
    %p184 = por %p182, %p183
    %p185 = scmp.ne.s32.totalorder %s177, %s180
    %p186 = scmp.eq.s32.totalorder %s15, 0
    %p187 = por %p185, %p186
    %p188 = scmp.ne.s32.totalorder %s177, %s180
    %p189 = scmp.eq.s32.totalorder %s20, 3
    %p190 = por %p188, %p189
    %p191 = scmp.ne.s32.totalorder %s180, %s181
    %p192 = scmp.eq.s32.totalorder %s20, 0
    %p193 = por %p191, %p192
    %p194 = scmp.ne.s32.totalorder %s180, %s181
    %p195 = scmp.eq.s32.totalorder %s21, 3
    %p196 = por %p194, %p195
    %p198 = scmp.ne.s32.totalorder %s181, %s197
    %p199 = scmp.eq.s32.totalorder %s21, 0
    %p200 = por %p198, %p199
    %p201 = scmp.le.s32.totalorder 1, %s15
    %p202 = scmp.lt.s32.totalorder %s15, 5
    %p203 = pnand %p201, %p202
    %p204 = pneg %p203
    // Predicated region
    $region9: #{simple_nn_forward.1} parent=5 // pred_check
      _
    $region10: #{simple_nn_forward.1} parent=5 // pred_check_branch
      %206 = sbr.rel (%p203) target = $region12
    $region11: #{simple_nn_forward.1} parent=5 // pred_region
      %s207 = ssub.s32 %s15, 1
      // Predicated region
      $region13: #{simple_nn_forward.1} parent=11 // pred_check
        %p208 = pneg %p62
      $region14: #{simple_nn_forward.1} parent=11 // pred_check_branch
        %210 = sbr.rel (%p208) target = $region16
      $region15: #{simple_nn_forward.1} parent=11 // pred_region
        _
      $region16: #{simple_nn_forward.1} parent=11 // pred_fallthru
        _
      // Predicated region
      $region17: #{simple_nn_forward.1} parent=11 // pred_check
        %p211 = pneg %p83
      $region18: #{simple_nn_forward.1} parent=11 // pred_check_branch
        %213 = sbr.rel (%p211) target = $region20
      $region19: #{simple_nn_forward.1} parent=11 // pred_region
        _
      $region20: #{simple_nn_forward.1} parent=11 // pred_fallthru
        _
      // Predicated region
      $region21: #{simple_nn_forward.1} parent=11 // pred_check
        %p214 = pneg %p104
      $region22: #{simple_nn_forward.1} parent=11 // pred_check_branch
        %216 = sbr.rel (%p214) target = $region24
      $region23: #{simple_nn_forward.1} parent=11 // pred_region
        _
      $region24: #{simple_nn_forward.1} parent=11 // pred_fallthru
        _
      // Predicated region
      $region25: #{simple_nn_forward.1} parent=11 // pred_check
        %p217 = pneg %p125
      $region26: #{simple_nn_forward.1} parent=11 // pred_check_branch
        %219 = sbr.rel (%p217) target = $region28
      $region27: #{simple_nn_forward.1} parent=11 // pred_region
        _
      $region28: #{simple_nn_forward.1} parent=11 // pred_fallthru
        _
      // Predicated region
      $region29: #{simple_nn_forward.1} parent=11 // pred_check
        %p220 = pneg %p146
      $region30: #{simple_nn_forward.1} parent=11 // pred_check_branch
        %222 = sbr.rel (%p220) target = $region32
      $region31: #{simple_nn_forward.1} parent=11 // pred_region
        _
      $region32: #{simple_nn_forward.1} parent=11 // pred_fallthru
        _
      // Predicated region
      $region33: #{simple_nn_forward.1} parent=11 // pred_check
        %p223 = pneg %p167
      $region34: #{simple_nn_forward.1} parent=11 // pred_check_branch
        %225 = sbr.rel (%p223) target = $region36
      $region35: #{simple_nn_forward.1} parent=11 // pred_region
        _
      $region36: #{simple_nn_forward.1} parent=11 // pred_fallthru
        _
    $region12: #{simple_nn_forward.1} parent=5 // pred_fallthru
      _
    %p226 = scmp.lt.s32.totalorder %s15, 4
    // Predicated region
    $region37: #{simple_nn_forward.1} parent=5 // pred_check
      %p227 = pneg %p226
    $region38: #{simple_nn_forward.1} parent=5 // pred_check_branch
      %229 = sbr.rel (%p227) target = $region40
    $region39: #{simple_nn_forward.1} parent=5 // pred_region
      // Predicated region
      $region41: #{simple_nn_forward.1} parent=39 // pred_check
        %p230 = pneg %p35
      $region42: #{simple_nn_forward.1} parent=39 // pred_check_branch
        %232 = sbr.rel (%p230) target = $region44
      $region43: #{simple_nn_forward.1} parent=39 // pred_region
        %s233 = smul.u32 2, %s15
        %p234 = scmp.lt.s32.totalorder %s233, 7
        %s235 = scalar_select %p234, %s233, 7
        %s236 = smul.addr %s235, 4
        %s237 = scalar_lea.vmem %s0, %s236
        %s238 = smul.u32 2, %s15
      $region44: #{simple_nn_forward.1} parent=39 // pred_fallthru
        _
    $region40: #{simple_nn_forward.1} parent=5 // pred_fallthru
      _
    %p239 = scmp.le.s32.totalorder 1, %s15
    %p240 = scmp.lt.s32.totalorder %s15, 5
    %p241 = pnand %p239, %p240
    %p242 = pneg %p241
    // Predicated region
    $region45: #{simple_nn_forward.1} parent=5 // pred_check
      _
    $region46: #{simple_nn_forward.1} parent=5 // pred_check_branch
      %244 = sbr.rel (%p241) target = $region48
    $region47: #{simple_nn_forward.1} parent=5 // pred_region
      %s245 = ssub.s32 %s15, 1
      %s246 = smul.u32 2, %s20
      %p247 = scmp.lt.s32.totalorder %s246, 7
      %s248 = scalar_select %p247, %s246, 7
      %s249 = smul.addr %s248, 4
      %s250 = scalar_lea.vmem %s0, %s249
      %p251 = pneg %p41
      %p252 = pneg %p38
      %p253 = pneg %p62
      %p254 = pneg %p59
      %p255 = pneg %p83
      %p256 = pneg %p80
      %p257 = pneg %p104
      %p258 = pneg %p101
      %p259 = pneg %p125
      %p260 = pneg %p122
      %p261 = pneg %p146
      %p262 = pneg %p143
      %p263 = pneg %p167
      %p264 = pneg %p164
      %p265 = pneg %p193
      %p266 = pneg %p190
      %s267 = smul.u32 2, %s20
      %p268 = scmp.lt.s32.totalorder %s267, 7
      %s269 = scalar_select %p268, %s267, 7
      %s270 = smul.addr %s269, 8
      %s271 = scalar_lea.vmem %s7, %s270
      %s272 = smul.u32 2, %s20
      %p273 = scmp.lt.s32.totalorder %s272, 7
      %s274 = scalar_select %p273, %s272, 7
      %s275 = smul.addr %s274, 4
      %s276 = scalar_lea.vmem %s0, %s275
      %s277 = smul.u32 2, %s20
      %s278 = smul.u32 2, %s20
      %p279 = scmp.lt.s32.totalorder %s278, 7
      %s280 = scalar_select %p279, %s278, 7
      %s281 = smul.addr %s280, 8
      %s282 = scalar_lea.vmem %s7, %s281
      %s283 = smul.u32 2, %s20
      %v285 = vld [vmem:[%s276] sm:$0xf]
      %v286 = vld [vmem:[%s276 + $0x4] sm:$0xf]
      %v287 = vld [vmem:[%s1] sm:$0xf]
      %v288 = vld [vmem:[%s1 + $0x4] sm:$0xf]
      %v289 = vld [vmem:[%s1 + $0x8] sm:$0xf]
      %v290 = vld [vmem:[%s1 + $0xc] sm:$0xf]
      %v291 = vld [vmem:[%s2] sm:$0x1]
      %v293 = vperm.slane %v291, 0
      %v297 = vunpack.c.l.b16 %v285
      %v298 = vunpack.c.l.b16 %v286
      %v299 = vpack.c.b16 %v298, %v297
      %v304 = vunpack.c.l.b16 %v287
      %v305 = vunpack.c.l.b16 %v288
      %v306 = vunpack.c.l.b16 %v289
      %v307 = vunpack.c.l.b16 %v290
      %v308 = vpack.c.b16 %v305, %v304
      %v309 = vpack.c.b16 %v307, %v306
      %vm312 = vcmask 261120
      %v314 = vsel %vm312, %v299, 0
      %316 = vmatpush.bf16.msra.mxu0 0
      %317 = vmatpush.bf16.msra.mxu0 0
      %318 = vmatpush.bf16.msra.mxu0 0
      %319 = vmatpush.bf16.msra.mxu0 0
      %320 = vmatpush.bf16.msra.mxu0 0
      %321 = vmatpush.bf16.msra.mxu0 0
      %322 = vmatpush.bf16.msra.mxu0 %v309
      %323 = vmatpush.bf16.msra.mxu0 %v308
      %324 = vmatmul.bf16.gmra.mxu0 %v314
      %v325 = vpop.f32.mrf.mxu0
      %v326 = vadd.f32 %v293, %v325
      %v327 = vpop.f32.mrf.mxu0
      %v328 = vadd.f32 %v293, %v327
      %329 = vdwg.mxu0
      %v330 = vmax.f32 %v326, 0.0
      %v331 = vmax.f32 %v328, 0.0
      %v332 = vpack.c.bf16 %v331, %v330
      %v333 = vld [vmem:[%s3] sm:$0xf]
      %v334 = vld [vmem:[%s3 + $0x4] sm:$0xf]
      %v335 = vld [vmem:[%s3 + $0x8] sm:$0xf]
      %v336 = vld [vmem:[%s3 + $0xc] sm:$0xf]
      %v337 = vld [vmem:[%s3 + $0x10] sm:$0xf]
      %v338 = vld [vmem:[%s3 + $0x14] sm:$0xf]
      %v339 = vld [vmem:[%s3 + $0x18] sm:$0xf]
      %v340 = vld [vmem:[%s3 + $0x1c] sm:$0xf]
      %v341 = vld [vmem:[%s3 + $0x20] sm:$0xf]
      %v342 = vld [vmem:[%s3 + $0x24] sm:$0xf]
      %v343 = vld [vmem:[%s3 + $0x28] sm:$0xf]
      %v344 = vld [vmem:[%s3 + $0x2c] sm:$0xf]
      %v345 = vld [vmem:[%s3 + $0x30] sm:$0xf]
      %v346 = vld [vmem:[%s3 + $0x34] sm:$0xf]
      %v347 = vld [vmem:[%s3 + $0x38] sm:$0xf]
      %v348 = vld [vmem:[%s3 + $0x3c] sm:$0xf]
      %v349 = vld [vmem:[%s4] sm:$0x1]
      %v351 = vperm.slane %v349, 0
      %v369 = vunpack.c.l.b16 %v333
      %v370 = vunpack.c.l.b16 %v334
      %v371 = vunpack.c.l.b16 %v335
      %v372 = vunpack.c.l.b16 %v336
      %v373 = vunpack.c.l.b16 %v337
      %v374 = vunpack.c.l.b16 %v338
      %v375 = vunpack.c.l.b16 %v339
      %v376 = vunpack.c.l.b16 %v340
      %v377 = vunpack.c.l.b16 %v341
      %v378 = vunpack.c.l.b16 %v342
      %v379 = vunpack.c.l.b16 %v343
      %v380 = vunpack.c.l.b16 %v344
      %v381 = vunpack.c.l.b16 %v345
      %v382 = vunpack.c.l.b16 %v346
      %v383 = vunpack.c.l.b16 %v347
      %v384 = vunpack.c.l.b16 %v348
      %v385 = vpack.c.b16 %v370, %v369
      %v386 = vpack.c.b16 %v372, %v371
      %v387 = vpack.c.b16 %v374, %v373
      %v388 = vpack.c.b16 %v376, %v375
      %v389 = vpack.c.b16 %v378, %v377
      %v390 = vpack.c.b16 %v380, %v379
      %v391 = vpack.c.b16 %v382, %v381
      %v392 = vpack.c.b16 %v384, %v383
      %401 = vmatpush.bf16.msra.mxu0 %v392
      %402 = vmatpush.bf16.msra.mxu0 %v391
      %403 = vmatpush.bf16.msra.mxu0 %v390
      %404 = vmatpush.bf16.msra.mxu0 %v389
      %405 = vmatpush.bf16.msra.mxu0 %v388
      %406 = vmatpush.bf16.msra.mxu0 %v387
      %407 = vmatpush.bf16.msra.mxu0 %v386
      %408 = vmatpush.bf16.msra.mxu0 %v385
      %409 = vmatmul.bf16.gmra.mxu0 %v332
      %v410 = vpop.f32.mrf.mxu0
      %v411 = vadd.f32 %v351, %v410
      %v412 = vpop.f32.mrf.mxu0
      %v413 = vadd.f32 %v351, %v412
      %414 = vdwg.mxu0
      %v415 = vmax.f32 %v411, 0.0
      %v416 = vmax.f32 %v413, 0.0
      %v417 = vld [vmem:[%s5] sm:$0x1]
      %v419 = vperm.slane %v417, 0
      %v421 = vmul.f32 %v415, %v419
      %v422 = vmul.f32 %v416, %v419
      %vm423 = vcmask 523264
      %v424 = vsel %vm423, %v421, 0.0
      %425 = vadd.xlane.f32.xlu0 %v424
      %v426 = vpop.xlane.xlu0 %425
      %v427 = vsel %vm423, %v422, 0.0
      %428 = vadd.xlane.f32.xlu0 %v427
      %v429 = vpop.xlane.xlu0 %428
      %v430 = vld [vmem:[#allocation2] sm:$0x1]
      %v432 = vperm.slane %v430, 0
      %v434 = vadd.f32 %v426, %v432
      %v435 = vadd.f32 %v429, %v432
      %v436 = vxor.u32 %v434, 2147483648
      %v437 = vxor.u32 %v435, 2147483648
      %v438 = vmul.f32 %v436, 1.442695
      %v439 = vpow.pop %v438
      %v440 = vmul.f32 %v437, 1.442695
      %v441 = vpow.pop %v440
      %v442 = vadd.f32 %v439, 1.0
      %v443 = vadd.f32 %v441, 1.0
      %v444 = vrcp.pop %v442
      %v445 = vmul.f32 %v442, %v444
      %v446 = vsub.f32 1.0, %v445
      %v447 = vmul.f32 %v444, %v446
      %v448 = vadd.f32 %v444, %v447
      %vm449 = vweird.f32 %v442
      %vm450 = vweird.f32 %v444
      %vm451 = vmor %vm449, %vm450
      %v452 = vsel %vm451, %v444, %v448
      %v453 = vand.u32 2147483647, %v442
      %vm454 = vcmp.eq.f32.partialorder %v453, 8.507059e+37
      %v455 = vand.u32 %v442, 2147483648
      %v456 = vor.u32 1.1754944e-38, %v455
      %v457 = vsel %vm454, %v456, %v452
      %v458 = vmul.f32 1.0, %v457
      %v459 = vrcp.pop %v443
      %v460 = vmul.f32 %v443, %v459
      %v461 = vsub.f32 1.0, %v460
      %v462 = vmul.f32 %v459, %v461
      %v463 = vadd.f32 %v459, %v462
      %vm464 = vweird.f32 %v443
      %vm465 = vweird.f32 %v459
      %vm466 = vmor %vm464, %vm465
      %v467 = vsel %vm466, %v459, %v463
      %v468 = vand.u32 2147483647, %v443
      %vm469 = vcmp.eq.f32.partialorder %v468, 8.507059e+37
      %v470 = vand.u32 %v443, 2147483648
      %v471 = vor.u32 1.1754944e-38, %v470
      %v472 = vsel %vm469, %v471, %v467
      %v473 = vmul.f32 1.0, %v472
      %vm474 = vcmask 7168
      %475 = vst.msk [vmem:[%s282] sm:$0xff] %vm474, %v458
      %476 = vst.msk [vmem:[%s282 + $0x8] sm:$0xff] %vm474, %v473
      %s477 = smul.u32 2, %s20
      %p478 = scmp.lt.s32.totalorder %s477, 7
      %s479 = scalar_select %p478, %s477, 7
      %s480 = smul.addr %s479, 8
      %s481 = scalar_lea.vmem %s7, %s480
      // Predicated region
      $region49: #{simple_nn_forward.1} parent=47 // pred_check
        %p482 = pneg %p190
      $region50: #{simple_nn_forward.1} parent=47 // pred_check_branch
        %484 = sbr.rel (%p482) target = $region52
      $region51: #{simple_nn_forward.1} parent=47 // pred_region
        %s485 = smul.u32 2, %s20
      $region52: #{simple_nn_forward.1} parent=47 // pred_fallthru
        _
    $region48: #{simple_nn_forward.1} parent=5 // pred_fallthru
      _
    %p486 = scmp.le.s32.totalorder 2, %s15
    // Predicated region
    $region53: #{simple_nn_forward.1} parent=5 // pred_check
      %p487 = pneg %p486
    $region54: #{simple_nn_forward.1} parent=5 // pred_check_branch
      %489 = sbr.rel (%p487) target = $region56
    $region55: #{simple_nn_forward.1} parent=5 // pred_region
      %s490 = ssub.s32 %s15, 2
      // Predicated region
      $region57: #{simple_nn_forward.1} parent=55 // pred_check
        %p491 = pneg %p196
      $region58: #{simple_nn_forward.1} parent=55 // pred_check_branch
        %493 = sbr.rel (%p491) target = $region60
      $region59: #{simple_nn_forward.1} parent=55 // pred_region
        %s494 = smul.u32 2, %s21
        %p495 = scmp.lt.s32.totalorder %s494, 7
        %s496 = scalar_select %p495, %s494, 7
        %s497 = smul.addr %s496, 8
        %s498 = scalar_lea.vmem %s7, %s497
      $region60: #{simple_nn_forward.1} parent=55 // pred_fallthru
        _
    $region56: #{simple_nn_forward.1} parent=5 // pred_fallthru
      _
  $region6: #{simple_nn_forward.1} parent=0 // loop_footer
    %s19 = sadd.s32 1, %s15
  $region7: #{simple_nn_forward.1} parent=0 // loop_footer_branch
    %14 = sbr.rel target = $region3
  $region8: #{simple_nn_forward.1} parent=0 // loop_exit
    _

</llo_original>
